<compile_context>
chip_gen: v6e
topology: v6e:2x2x1
jax: 0.10.0
libtpu: 0.0.40
codegen_flags: <defaults>
</compile_context>

<pallas_src>
import functools

import jax
import jax.numpy as jnp
from jax.experimental import pallas as pl
from jax.experimental.pallas import tpu as pltpu


def attention_kernel(x_ref, y_ref, wq_ref, wk_ref, wv_ref, wp_ref, bp_ref,
                     out_ref, attn_ref, *, scale):
    """One (batch b, head h) grid step.

    x_ref   : (1, N,  C)  bf16   query tokens for batch b
    y_ref   : (1, N1, C)  bf16   kv tokens for batch b
    wq_ref  : (1, C, D)   bf16   head-h slice of q weight
    wk_ref  : (1, C, D)   bf16   head-h slice of k weight
    wv_ref  : (1, C, D)   bf16   head-h slice of v weight
    wp_ref  : (1, D, C)   bf16   head-h slice of proj weight (rows)
    bp_ref  : (1, C)      f32    proj bias
    out_ref : (1, N, C)   f32    resident across h (accumulator)
    attn_ref: (1, 1, N, N1) f32  per-(b, h) attention probabilities
    """
    h = pl.program_id(1)

    x = x_ref[0]          # (N,  C) bf16
    y = y_ref[0]          # (N1, C) bf16
    wq = wq_ref[0]        # (C, D)  bf16
    wk = wk_ref[0]
    wv = wv_ref[0]
    wp = wp_ref[0]        # (D, C)  bf16

    # Per-head projections: bf16 operands, f32 accumulation (MXU).
    # Scale folded into q (cheaper than scaling the (N, N1) scores).
    q = jnp.dot(x, wq, preferred_element_type=jnp.float32) * scale   # (N,  D) f32
    k = jnp.dot(y, wk, preferred_element_type=jnp.float32)           # (N1, D) f32
    v = jnp.dot(y, wv, preferred_element_type=jnp.float32)           # (N1, D) f32

    # Scores: contract over D (tiny contraction -> occupancy-bound; keep f32
    # operands so the softmax input stays exact).
    scores = jax.lax.dot_general(
        q, k, dimension_numbers=(((1,), (1,)), ((), ())),
        preferred_element_type=jnp.float32)                          # (N, N1)

    scores = scores - jnp.max(scores, axis=-1, keepdims=True)
    e = jnp.exp(scores)
    denom = jnp.sum(e, axis=-1, keepdims=True)
    attn = e * pl.reciprocal(denom, approx=True)                     # (N, N1) f32
    # TODO(synk): attn_drop / proj_drop are identity (p=0.0 defaults); no dropout RNG emitted.
    attn_ref[0, 0] = attn

    # Context for this head and its contribution to the output projection.
    ctx = jnp.dot(attn.astype(jnp.bfloat16), v.astype(jnp.bfloat16),
                  preferred_element_type=jnp.float32)                # (N, D) f32

    @pl.when(h == 0)
    def _():
        # Initialize the resident output block with the projection bias.
        out_ref[0] = jnp.broadcast_to(bp_ref[...],
                                      (out_ref.shape[1], out_ref.shape[2]))

    out_ref[0] = out_ref[0] + jnp.dot(ctx.astype(jnp.bfloat16), wp,
                                      preferred_element_type=jnp.float32)


def attention_forward(x, y, wq, wkv, wp, bp, *, num_heads, scale):
    B, N, C = x.shape
    N1 = y.shape[1]
    H = num_heads
    assert C % H == 0, "dim must be divisible by num_heads"
    D = C // H

    # Split fused kv weight and build head-major weight slabs once in the
    # wrapper (layout plumbing, done by XLA outside the kernel).
    wk = wkv[:, :C]
    wv = wkv[:, C:]
    wq_h = wq.reshape(C, H, D).transpose(1, 0, 2).astype(jnp.bfloat16)   # (H, C, D)
    wk_h = wk.reshape(C, H, D).transpose(1, 0, 2).astype(jnp.bfloat16)   # (H, C, D)
    wv_h = wv.reshape(C, H, D).transpose(1, 0, 2).astype(jnp.bfloat16)   # (H, C, D)
    wp_h = wp.reshape(H, D, C).astype(jnp.bfloat16)                      # (H, D, C)

    x_b = x.astype(jnp.bfloat16)
    y_b = y.astype(jnp.bfloat16)
    bp_f = bp.reshape(1, C).astype(jnp.float32)

    # Advisory cost estimate for XLA's scheduler.
    flops = 2 * B * H * (N * C * D + 2 * N1 * C * D + 2 * N * N1 * D + N * D * C)
    transcendentals = B * H * N * (N1 + 1)
    bytes_accessed = (x_b.size * 2 + y_b.size * 2
                      + (wq_h.size + wk_h.size + wv_h.size + wp_h.size) * 2
                      + bp_f.size * 4
                      + B * N * C * 4 + B * H * N * N1 * 4)

    kernel = functools.partial(attention_kernel, scale=scale)

    out, attn = pl.pallas_call(
        kernel,
        out_shape=(
            jax.ShapeDtypeStruct((B, N, C), jnp.float32),
            jax.ShapeDtypeStruct((B, H, N, N1), jnp.float32),
        ),
        grid=(B, H),
        in_specs=[
            pl.BlockSpec((1, N, C), lambda b, h: (b, 0, 0)),   # x  (constant over h)
            pl.BlockSpec((1, N1, C), lambda b, h: (b, 0, 0)),  # y  (constant over h)
            pl.BlockSpec((1, C, D), lambda b, h: (h, 0, 0)),   # wq head slice
            pl.BlockSpec((1, C, D), lambda b, h: (h, 0, 0)),   # wk head slice
            pl.BlockSpec((1, C, D), lambda b, h: (h, 0, 0)),   # wv head slice
            pl.BlockSpec((1, D, C), lambda b, h: (h, 0, 0)),   # wp head slice
            pl.BlockSpec((1, C), lambda b, h: (0, 0)),         # proj bias
        ],
        out_specs=(
            pl.BlockSpec((1, N, C), lambda b, h: (b, 0, 0)),        # out (resident over h)
            pl.BlockSpec((1, 1, N, N1), lambda b, h: (b, h, 0, 0)),  # attn
        ),
        compiler_params=pltpu.CompilerParams(
            dimension_semantics=("parallel", "arbitrary"),
            vmem_limit_bytes=32 * 1024 * 1024),
        cost_estimate=pl.CostEstimate(flops=flops,
                                      transcendentals=transcendentals,
                                      bytes_accessed=bytes_accessed),
    )(x_b, y_b, wq_h, wk_h, wv_h, wp_h, bp_f)

    return out, attn


def reference_forward(x, y, wq, wkv, wp, bp, *, num_heads, scale):
    """Plain-JAX (f32) mirror of the PyTorch forward, for verification."""
    B, N, C = x.shape
    N1 = y.shape[1]
    H = num_heads
    D = C // H
    q = (x @ wq).reshape(B, N, H, D).transpose(0, 2, 1, 3)
    kv = y @ wkv
    k = kv[..., :C].reshape(B, N1, H, D).transpose(0, 2, 1, 3)
    v = kv[..., C:].reshape(B, N1, H, D).transpose(0, 2, 1, 3)
    attn = jax.nn.softmax(jnp.einsum('bhnd,bhmd->bhnm', q, k) * scale, axis=-1)
    out = jnp.einsum('bhnm,bhmd->bhnd', attn, v).transpose(0, 2, 1, 3).reshape(B, N, C)
    out = out @ wp + bp
    return out, attn


if __name__ == "__main__":
    # Small shapes consistent with the module: dim=C=32, num_heads=4 -> head_dim=8.
    B, N, N1, C = 2, 8, 16, 32
    num_heads = 4
    head_dim = C // num_heads
    scale = head_dim ** (-0.5)

    key = jax.random.PRNGKey(0)
    kx, ky, kq, kkv, kp, kb = jax.random.split(key, 6)

    x = jax.random.normal(kx, (B, N, C), dtype=jnp.float32)
    y = jax.random.normal(ky, (B, N1, C), dtype=jnp.float32)

    # Deterministic parameter init (weights already transposed: in x out).
    wq = jax.random.normal(kq, (C, C), dtype=jnp.float32) * 0.05
    wkv = jax.random.normal(kkv, (C, 2 * C), dtype=jnp.float32) * 0.05
    wp = jax.random.normal(kp, (C, C), dtype=jnp.float32) * 0.05
    bp = jax.random.normal(kb, (C,), dtype=jnp.float32) * 0.05

    out, attn = attention_forward(x, y, wq, wkv, wp, bp,
                                  num_heads=num_heads, scale=scale)
    jax.block_until_ready((out, attn))

    out_ref, attn_ref = reference_forward(x, y, wq, wkv, wp, bp,
                                          num_heads=num_heads, scale=scale)
    assert out.shape == (B, N, C) and attn.shape == (B, num_heads, N, N1)
    # bf16 MXU operands + approx reciprocal -> loosened tolerances.
    assert jnp.allclose(attn, attn_ref, atol=2e-2, rtol=2e-2)
    assert jnp.allclose(out, out_ref, atol=2e-2, rtol=2e-2)

    print("KERNEL_OK")
</pallas_src>

<mosaic_0001>
module attributes {stable_mosaic.version = 11 : i64} {
  func.func @attention_kernel(%arg0: i32, %arg1: i32, %arg2: memref<1x8x32xbf16, #tpu.memory_space<vmem>>, %arg3: memref<1x16x32xbf16, #tpu.memory_space<vmem>>, %arg4: memref<1x32x8xbf16, #tpu.memory_space<vmem>>, %arg5: memref<1x32x8xbf16, #tpu.memory_space<vmem>>, %arg6: memref<1x32x8xbf16, #tpu.memory_space<vmem>>, %arg7: memref<1x8x32xbf16, #tpu.memory_space<vmem>>, %arg8: memref<1x32xf32, #tpu.memory_space<vmem>>, %arg9: memref<1x8x32xf32, #tpu.memory_space<vmem>>, %arg10: memref<1x1x8x16xf32, #tpu.memory_space<vmem>>) attributes {dimension_semantics = [#tpu.dimension_semantics<parallel>, #tpu.dimension_semantics<arbitrary>], iteration_bounds = array<i64: 2, 4>, scalar_prefetch = 0 : i64, scratch_operands = 0 : i64, tpu.core_type = #tpu.core_type<tc>, window_params = [{transform_indices = @transform_0, window_bounds = array<i64: 1, 8, 32>}, {transform_indices = @transform_1, window_bounds = array<i64: 1, 16, 32>}, {transform_indices = @transform_2, window_bounds = array<i64: 1, 32, 8>}, {transform_indices = @transform_3, window_bounds = array<i64: 1, 32, 8>}, {transform_indices = @transform_4, window_bounds = array<i64: 1, 32, 8>}, {transform_indices = @transform_5, window_bounds = array<i64: 1, 8, 32>}, {pipeline_mode = #tpu.pipeline_mode<synchronous>, transform_indices = @transform_6, window_bounds = array<i64: 1, 32>}, {transform_indices = @transform_7, window_bounds = array<i64: 1, 8, 32>}, {transform_indices = @transform_8, window_bounds = array<i64: 1, 1, 8, 16>}]} {
    %c0 = arith.constant 0 : index
    %c0_0 = arith.constant 0 : index
    %c0_1 = arith.constant 0 : index
    %0 = vector.load %arg2[%c0, %c0_0, %c0_1] : memref<1x8x32xbf16, #tpu.memory_space<vmem>>, vector<1x8x32xbf16>
    %1 = vector.shape_cast %0 : vector<1x8x32xbf16> to vector<8x32xbf16>
    %c0_2 = arith.constant 0 : index
    %c0_3 = arith.constant 0 : index
    %c0_4 = arith.constant 0 : index
    %2 = vector.load %arg3[%c0_2, %c0_3, %c0_4] : memref<1x16x32xbf16, #tpu.memory_space<vmem>>, vector<1x16x32xbf16>
    %3 = vector.shape_cast %2 : vector<1x16x32xbf16> to vector<16x32xbf16>
    %c0_5 = arith.constant 0 : index
    %c0_6 = arith.constant 0 : index
    %c0_7 = arith.constant 0 : index
    %4 = vector.load %arg4[%c0_5, %c0_6, %c0_7] : memref<1x32x8xbf16, #tpu.memory_space<vmem>>, vector<1x32x8xbf16>
    %5 = vector.shape_cast %4 : vector<1x32x8xbf16> to vector<32x8xbf16>
    %c0_8 = arith.constant 0 : index
    %c0_9 = arith.constant 0 : index
    %c0_10 = arith.constant 0 : index
    %6 = vector.load %arg5[%c0_8, %c0_9, %c0_10] : memref<1x32x8xbf16, #tpu.memory_space<vmem>>, vector<1x32x8xbf16>
    %7 = vector.shape_cast %6 : vector<1x32x8xbf16> to vector<32x8xbf16>
    %c0_11 = arith.constant 0 : index
    %c0_12 = arith.constant 0 : index
    %c0_13 = arith.constant 0 : index
    %8 = vector.load %arg6[%c0_11, %c0_12, %c0_13] : memref<1x32x8xbf16, #tpu.memory_space<vmem>>, vector<1x32x8xbf16>
    %9 = vector.shape_cast %8 : vector<1x32x8xbf16> to vector<32x8xbf16>
    %c0_14 = arith.constant 0 : index
    %c0_15 = arith.constant 0 : index
    %c0_16 = arith.constant 0 : index
    %10 = vector.load %arg7[%c0_14, %c0_15, %c0_16] : memref<1x8x32xbf16, #tpu.memory_space<vmem>>, vector<1x8x32xbf16>
    %11 = vector.shape_cast %10 : vector<1x8x32xbf16> to vector<8x32xbf16>
    %cst = arith.constant dense<0.000000e+00> : vector<8x8xf32>
    %12 = tpu.matmul %1, %5, %cst {dimension_numbers = #tpu.dot_dimension_numbers<[1], [0], [0], [1], [0, 0, 1, 1], [], []>} : vector<8x32xbf16>, vector<32x8xbf16>, vector<8x8xf32> -> vector<8x8xf32>
    %cst_17 = arith.constant 0.353553385 : f32
    %13 = vector.broadcast %cst_17 : f32 to vector<8x8xf32>
    %14 = arith.mulf %12, %13 : vector<8x8xf32>
    %cst_18 = arith.constant dense<0.000000e+00> : vector<16x8xf32>
    %15 = tpu.matmul %3, %7, %cst_18 {dimension_numbers = #tpu.dot_dimension_numbers<[1], [0], [0], [1], [0, 0, 1, 1], [], []>} : vector<16x32xbf16>, vector<32x8xbf16>, vector<16x8xf32> -> vector<16x8xf32>
    %cst_19 = arith.constant dense<0.000000e+00> : vector<16x8xf32>
    %16 = tpu.matmul %3, %9, %cst_19 {dimension_numbers = #tpu.dot_dimension_numbers<[1], [0], [0], [1], [0, 0, 1, 1], [], []>} : vector<16x32xbf16>, vector<32x8xbf16>, vector<16x8xf32> -> vector<16x8xf32>
    %cst_20 = arith.constant dense<0.000000e+00> : vector<8x16xf32>
    %17 = tpu.matmul %14, %15, %cst_20 {dimension_numbers = #tpu.dot_dimension_numbers<[1], [1], [0], [0], [0, 0, 1, 0], [], []>} : vector<8x8xf32>, vector<16x8xf32>, vector<8x16xf32> -> vector<8x16xf32>
    %cst_21 = arith.constant dense<0xFF800000> : vector<8xf32>
    %18 = vector.multi_reduction <maximumf>, %17, %cst_21 [1] : vector<8x16xf32> to vector<8xf32>
    %19 = vector.shape_cast %18 : vector<8xf32> to vector<8x1xf32>
    %20 = vector.broadcast %19 : vector<8x1xf32> to vector<8x16xf32>
    %21 = arith.subf %17, %20 : vector<8x16xf32>
    %22 = math.exp %21 : vector<8x16xf32>
    %cst_22 = arith.constant dense<0.000000e+00> : vector<8xf32>
    %23 = vector.multi_reduction <add>, %22, %cst_22 [1] : vector<8x16xf32> to vector<8xf32>
    %24 = vector.shape_cast %23 : vector<8xf32> to vector<8x1xf32>
    %25 = tpu.reciprocal %24 {approx = true} : vector<8x1xf32> -> vector<8x1xf32>
    %26 = vector.broadcast %25 : vector<8x1xf32> to vector<8x16xf32>
    %27 = arith.mulf %22, %26 : vector<8x16xf32>
    %c0_23 = arith.constant 0 : index
    %c0_24 = arith.constant 0 : index
    %c0_25 = arith.constant 0 : index
    %c0_26 = arith.constant 0 : index
    %28 = vector.load %arg10[%c0_23, %c0_24, %c0_25, %c0_26] : memref<1x1x8x16xf32, #tpu.memory_space<vmem>>, vector<1x1x8x16xf32>
    %29 = vector.shape_cast %28 : vector<1x1x8x16xf32> to vector<8x16xf32>
    %30 = vector.shape_cast %27 : vector<8x16xf32> to vector<1x1x8x16xf32>
    tpu.vector_store %arg10[%c0_23, %c0_24, %c0_25, %c0_26], %30 {strides = array<i32>} : memref<1x1x8x16xf32, #tpu.memory_space<vmem>>, vector<1x1x8x16xf32>,
    %31 = arith.truncf %27 : vector<8x16xf32> to vector<8x16xbf16>
    %32 = arith.truncf %16 : vector<16x8xf32> to vector<16x8xbf16>
    %cst_27 = arith.constant dense<0.000000e+00> : vector<8x8xf32>
    %33 = tpu.matmul %31, %32, %cst_27 {dimension_numbers = #tpu.dot_dimension_numbers<[1], [0], [0], [1], [0, 0, 1, 1], [], []>} : vector<8x16xbf16>, vector<16x8xbf16>, vector<8x8xf32> -> vector<8x8xf32>
    %c0_i32 = arith.constant 0 : i32
    %34 = arith.cmpi eq, %arg1, %c0_i32 : i32
    %35 = arith.extui %34 : i1 to i32
    %c0_i32_28 = arith.constant 0 : i32
    %36 = arith.cmpi ne, %35, %c0_i32_28 : i32
    scf.if %36 {
      %c0_36 = arith.constant 0 : index
      %c0_37 = arith.constant 0 : index
      %45 = vector.load %arg8[%c0_36, %c0_37] : memref<1x32xf32, #tpu.memory_space<vmem>>, vector<1x32xf32>
      %46 = vector.shape_cast %45 : vector<1x32xf32> to vector<1x32xf32>
      %47 = vector.broadcast %46 : vector<1x32xf32> to vector<8x32xf32>
      %c0_38 = arith.constant 0 : index
      %c0_39 = arith.constant 0 : index
      %c0_40 = arith.constant 0 : index
      %48 = vector.load %arg9[%c0_38, %c0_39, %c0_40] : memref<1x8x32xf32, #tpu.memory_space<vmem>>, vector<1x8x32xf32>
      %49 = vector.shape_cast %48 : vector<1x8x32xf32> to vector<8x32xf32>
      %50 = vector.shape_cast %47 : vector<8x32xf32> to vector<1x8x32xf32>
      tpu.vector_store %arg9[%c0_38, %c0_39, %c0_40], %50 {strides = array<i32>} : memref<1x8x32xf32, #tpu.memory_space<vmem>>, vector<1x8x32xf32>,
    } else {
    }
    %c0_29 = arith.constant 0 : index
    %c0_30 = arith.constant 0 : index
    %c0_31 = arith.constant 0 : index
    %37 = vector.load %arg9[%c0_29, %c0_30, %c0_31] : memref<1x8x32xf32, #tpu.memory_space<vmem>>, vector<1x8x32xf32>
    %38 = vector.shape_cast %37 : vector<1x8x32xf32> to vector<8x32xf32>
    %39 = arith.truncf %33 : vector<8x8xf32> to vector<8x8xbf16>
    %cst_32 = arith.constant dense<0.000000e+00> : vector<8x32xf32>
    %40 = tpu.matmul %39, %11, %cst_32 {dimension_numbers = #tpu.dot_dimension_numbers<[1], [0], [0], [1], [0, 0, 1, 1], [], []>} : vector<8x8xbf16>, vector<8x32xbf16>, vector<8x32xf32> -> vector<8x32xf32>
    %41 = arith.addf %38, %40 : vector<8x32xf32>
    %c0_33 = arith.constant 0 : index
    %c0_34 = arith.constant 0 : index
    %c0_35 = arith.constant 0 : index
    %42 = vector.load %arg9[%c0_33, %c0_34, %c0_35] : memref<1x8x32xf32, #tpu.memory_space<vmem>>, vector<1x8x32xf32>
    %43 = vector.shape_cast %42 : vector<1x8x32xf32> to vector<8x32xf32>
    %44 = vector.shape_cast %41 : vector<8x32xf32> to vector<1x8x32xf32>
    tpu.vector_store %arg9[%c0_33, %c0_34, %c0_35], %44 {strides = array<i32>} : memref<1x8x32xf32, #tpu.memory_space<vmem>>, vector<1x8x32xf32>,
    return
  }
  func.func @transform_0(%arg0: i32, %arg1: i32) -> (i32, i32, i32) {
    %c0_i32 = arith.constant 0 : i32
    %c0_i32_0 = arith.constant 0 : i32
    %c0_i32_1 = arith.constant 0 : i32
    return %arg0, %c0_i32, %c0_i32_0 : i32, i32, i32
  }
  func.func @transform_1(%arg0: i32, %arg1: i32) -> (i32, i32, i32) {
    %c0_i32 = arith.constant 0 : i32
    %c0_i32_0 = arith.constant 0 : i32
    %c0_i32_1 = arith.constant 0 : i32
    return %arg0, %c0_i32, %c0_i32_0 : i32, i32, i32
  }
  func.func @transform_2(%arg0: i32, %arg1: i32) -> (i32, i32, i32) {
    %c0_i32 = arith.constant 0 : i32
    %c0_i32_0 = arith.constant 0 : i32
    %c0_i32_1 = arith.constant 0 : i32
    return %arg1, %c0_i32, %c0_i32_0 : i32, i32, i32
  }
  func.func @transform_3(%arg0: i32, %arg1: i32) -> (i32, i32, i32) {
    %c0_i32 = arith.constant 0 : i32
    %c0_i32_0 = arith.constant 0 : i32
    %c0_i32_1 = arith.constant 0 : i32
    return %arg1, %c0_i32, %c0_i32_0 : i32, i32, i32
  }
  func.func @transform_4(%arg0: i32, %arg1: i32) -> (i32, i32, i32) {
    %c0_i32 = arith.constant 0 : i32
    %c0_i32_0 = arith.constant 0 : i32
    %c0_i32_1 = arith.constant 0 : i32
    return %arg1, %c0_i32, %c0_i32_0 : i32, i32, i32
  }
  func.func @transform_5(%arg0: i32, %arg1: i32) -> (i32, i32, i32) {
    %c0_i32 = arith.constant 0 : i32
    %c0_i32_0 = arith.constant 0 : i32
    %c0_i32_1 = arith.constant 0 : i32
    return %arg1, %c0_i32, %c0_i32_0 : i32, i32, i32
  }
  func.func @transform_6(%arg0: i32, %arg1: i32) -> (i32, i32) {
    %c0_i32 = arith.constant 0 : i32
    %c0_i32_0 = arith.constant 0 : i32
    %c0_i32_1 = arith.constant 0 : i32
    return %c0_i32, %c0_i32_0 : i32, i32
  }
  func.func @transform_7(%arg0: i32, %arg1: i32) -> (i32, i32, i32) {
    %c0_i32 = arith.constant 0 : i32
    %c0_i32_0 = arith.constant 0 : i32
    %c0_i32_1 = arith.constant 0 : i32
    return %arg0, %c0_i32, %c0_i32_0 : i32, i32, i32
  }
  func.func @transform_8(%arg0: i32, %arg1: i32) -> (i32, i32, i32, i32) {
    %c0_i32 = arith.constant 0 : i32
    %c0_i32_0 = arith.constant 0 : i32
    %c0_i32_1 = arith.constant 0 : i32
    return %arg0, %arg1, %c0_i32, %c0_i32_0 : i32, i32, i32, i32
  }
}

</mosaic_0001>

<llo_original>
// kernel: tpu_custom_call.1
$region0: #{tpu_custom_call.1}
  #allocation0 [shape = 'u32[]', space=smem, size = 0x4, offset = 0x4, fixed_abs, tag = 'smem constant byte address 0x4 - core index']
  #allocation1 [shape = 'u32[144,128]{1,0:T(1,128)}', space=vmem, size = 0x12000, scoped, tag = 'internal scratch']
  %s0 = inlined_call_operand.vmem [shape: bf16[2,8,32], index: 0, kind: input, shape index: {}]
  %s1 = inlined_call_operand.vmem [shape: bf16[2,16,32], index: 1, kind: input, shape index: {}]
  %s2 = inlined_call_operand.vmem [shape: bf16[4,32,8], index: 2, kind: input, shape index: {}]
  %s3 = inlined_call_operand.vmem [shape: bf16[4,32,8], index: 3, kind: input, shape index: {}]
  %s4 = inlined_call_operand.vmem [shape: bf16[4,32,8], index: 4, kind: input, shape index: {}]
  %s5 = inlined_call_operand.vmem [shape: bf16[4,8,32], index: 5, kind: input, shape index: {}]
  %s6 = inlined_call_operand.vmem [shape: f32[1,32], index: 6, kind: input, shape index: {}]
  %s7 = inlined_call_operand.hbm [shape: f32[2,8,32], index: 7, kind: output, shape index: {0}]
  %s8 = inlined_call_operand.hbm [shape: f32[2,4,8,16], index: 8, kind: output, shape index: {1}]
  %9 = xla_tuple %s7, %s8
  %s10 = sld [smem:[#allocation0]]
  $region73: #{tpu_custom_call.1} parent=0
    _
  %s12 = ssub.s32 1, %s10
  %s13 = scalar_select 0, %s12, %s10
  $region1: #{tpu_custom_call.1} parent=0
    #allocation2 [shape = 'u8[8192]{0}', space=vmem, size = 0x2000, scoped, tag = 'output window, operand 0']
    #allocation3 [shape = 's32[2]{0}', space=sflag, size = 0x8, scoped, tag = 'scoped memory for tpu_custom_call.1']
    #allocation4 [shape = 'u8[8192]{0}', space=vmem, size = 0x2000, scoped, tag = 'output window, operand 1']
    #allocation5 [shape = 's32[2]{0}', space=sflag, size = 0x8, scoped, tag = 'scoped memory for tpu_custom_call.1']
    %14 = vsyncpa [#allocation3], 0
    %s15 = scalar_lea.sflag [#allocation3], 1
    %16 = vsyncpa %s15, 0
    %17 = vsyncpa [#allocation5], 0
    %s18 = scalar_lea.sflag [#allocation5], 1
    %19 = vsyncpa %s18, 0
    loop: start=0, step=1, limit=10
    $region2: #{tpu_custom_call.1} parent=1 // loop_pre_header
      _
    $region3: #{tpu_custom_call.1} parent=1 // loop_header
      %s21 = sphi 0, %s25
      %p22 = scmp.ge.s32.totalorder %s21, 10
      %s28 = sphi 0, %s40
      %s29 = sphi 0, %s36
      %s30 = sphi 0, %s28
      %s31 = sphi 0, %s29
      %s32 = sphi 0, %s30
      %s33 = sphi 0, %s31
      %s43 = sphi 0, %s45
      %s46 = sphi 0, %s43
      %s47 = sphi 0, %s46
      %s63 = sphi 0, %s47
      %s69 = sphi 0, %s71
      %s72 = sphi 0, %s69
      %s73 = sphi 0, %s72
      %s89 = sphi 0, %s73
      %s95 = sphi 0, %s97
      %s98 = sphi 0, %s95
      %s99 = sphi 0, %s98
      %s115 = sphi 0, %s99
      %s121 = sphi 0, %s123
      %s124 = sphi 0, %s121
      %s125 = sphi 0, %s124
      %s141 = sphi 0, %s125
      %s147 = sphi 0, %s149
      %s150 = sphi 0, %s147
      %s151 = sphi 0, %s150
      %s167 = sphi 0, %s151
      %s173 = sphi 0, %s175
      %s176 = sphi 0, %s173
      %s177 = sphi 0, %s176
      %s193 = sphi 0, %s177
      %s197 = sphi 0, %s197
      %s199 = sphi 0, %s197
      %s200 = sphi 0, %s199
      %s214 = sphi 0, %s200
      %s220 = sphi 0, %s222
      %s223 = sphi 0, %s220
      %s224 = sphi 0, %s223
      %s240 = sphi 0, %s224
      %s248 = sphi 0, %s250
      %s251 = sphi 0, %s248
      %s252 = sphi 0, %s251
      %s268 = sphi 0, %s252
    $region4: #{tpu_custom_call.1} parent=1 // loop_header_branch
      %24 = sbr.rel (%p22) target = $region8
    $region5: #{tpu_custom_call.1} parent=1 // loop_body
      %s26 = ssub.s32 %s21, 1
      %s27 = ssub.s32 %s21, 2
      %s34 = sadd.s32 1, %s29
      %p35 = scmp.ge.s32.totalorder %s34, 4
      %s36 = scalar_select %p35, 0, %s34
      %s37 = sadd.s32 1, %s28
      %s38 = scalar_select %p35, %s37, %s28
      %p39 = scmp.ge.s32.totalorder %s38, 2
      %s40 = scalar_select %p39, 0, %s38
      %s41 = ssub.s32 %s28, %s40
      %p42 = scmp.eq.s32.totalorder %s41, 0
      %s44 = sadd.s32 %s43, 1
      %s45 = scalar_select %p42, %s43, %s44
      %p48 = pneg %p42
      %p49 = scmp.eq.s32.totalorder %s21, 7
      %p50 = por %p48, %p49
      %p51 = scmp.ne.s32.totalorder %s43, %s46
      %p52 = scmp.eq.s32.totalorder %s21, 0
      %p53 = por %p51, %p52
      %p54 = scmp.ne.s32.totalorder %s43, %s46
      %p55 = scmp.eq.s32.totalorder %s26, 7
      %p56 = por %p54, %p55
      %p57 = scmp.ne.s32.totalorder %s46, %s47
      %p58 = scmp.eq.s32.totalorder %s26, 0
      %p59 = por %p57, %p58
      %p60 = scmp.ne.s32.totalorder %s46, %s47
      %p61 = scmp.eq.s32.totalorder %s27, 7
      %p62 = por %p60, %p61
      %p64 = scmp.ne.s32.totalorder %s47, %s63
      %p65 = scmp.eq.s32.totalorder %s27, 0
      %p66 = por %p64, %p65
      %s67 = ssub.s32 %s28, %s40
      %p68 = scmp.eq.s32.totalorder %s67, 0
      %s70 = sadd.s32 %s69, 1
      %s71 = scalar_select %p68, %s69, %s70
      %p74 = pneg %p68
      %p75 = scmp.eq.s32.totalorder %s21, 7
      %p76 = por %p74, %p75
      %p77 = scmp.ne.s32.totalorder %s69, %s72
      %p78 = scmp.eq.s32.totalorder %s21, 0
      %p79 = por %p77, %p78
      %p80 = scmp.ne.s32.totalorder %s69, %s72
      %p81 = scmp.eq.s32.totalorder %s26, 7
      %p82 = por %p80, %p81
      %p83 = scmp.ne.s32.totalorder %s72, %s73
      %p84 = scmp.eq.s32.totalorder %s26, 0
      %p85 = por %p83, %p84
      %p86 = scmp.ne.s32.totalorder %s72, %s73
      %p87 = scmp.eq.s32.totalorder %s27, 7
      %p88 = por %p86, %p87
      %p90 = scmp.ne.s32.totalorder %s73, %s89
      %p91 = scmp.eq.s32.totalorder %s27, 0
      %p92 = por %p90, %p91
      %s93 = ssub.s32 %s29, %s36
      %p94 = scmp.eq.s32.totalorder %s93, 0
      %s96 = sadd.s32 %s95, 1
      %s97 = scalar_select %p94, %s95, %s96
      %p100 = pneg %p94
      %p101 = scmp.eq.s32.totalorder %s21, 7
      %p102 = por %p100, %p101
      %p103 = scmp.ne.s32.totalorder %s95, %s98
      %p104 = scmp.eq.s32.totalorder %s21, 0
      %p105 = por %p103, %p104
      %p106 = scmp.ne.s32.totalorder %s95, %s98
      %p107 = scmp.eq.s32.totalorder %s26, 7
      %p108 = por %p106, %p107
      %p109 = scmp.ne.s32.totalorder %s98, %s99
      %p110 = scmp.eq.s32.totalorder %s26, 0
      %p111 = por %p109, %p110
      %p112 = scmp.ne.s32.totalorder %s98, %s99
      %p113 = scmp.eq.s32.totalorder %s27, 7
      %p114 = por %p112, %p113
      %p116 = scmp.ne.s32.totalorder %s99, %s115
      %p117 = scmp.eq.s32.totalorder %s27, 0
      %p118 = por %p116, %p117
      %s119 = ssub.s32 %s29, %s36
      %p120 = scmp.eq.s32.totalorder %s119, 0
      %s122 = sadd.s32 %s121, 1
      %s123 = scalar_select %p120, %s121, %s122
      %p126 = pneg %p120
      %p127 = scmp.eq.s32.totalorder %s21, 7
      %p128 = por %p126, %p127
      %p129 = scmp.ne.s32.totalorder %s121, %s124
      %p130 = scmp.eq.s32.totalorder %s21, 0
      %p131 = por %p129, %p130
      %p132 = scmp.ne.s32.totalorder %s121, %s124
      %p133 = scmp.eq.s32.totalorder %s26, 7
      %p134 = por %p132, %p133
      %p135 = scmp.ne.s32.totalorder %s124, %s125
      %p136 = scmp.eq.s32.totalorder %s26, 0
      %p137 = por %p135, %p136
      %p138 = scmp.ne.s32.totalorder %s124, %s125
      %p139 = scmp.eq.s32.totalorder %s27, 7
      %p140 = por %p138, %p139
      %p142 = scmp.ne.s32.totalorder %s125, %s141
      %p143 = scmp.eq.s32.totalorder %s27, 0
      %p144 = por %p142, %p143
      %s145 = ssub.s32 %s29, %s36
      %p146 = scmp.eq.s32.totalorder %s145, 0
      %s148 = sadd.s32 %s147, 1
      %s149 = scalar_select %p146, %s147, %s148
      %p152 = pneg %p146
      %p153 = scmp.eq.s32.totalorder %s21, 7
      %p154 = por %p152, %p153
      %p155 = scmp.ne.s32.totalorder %s147, %s150
      %p156 = scmp.eq.s32.totalorder %s21, 0
      %p157 = por %p155, %p156
      %p158 = scmp.ne.s32.totalorder %s147, %s150
      %p159 = scmp.eq.s32.totalorder %s26, 7
      %p160 = por %p158, %p159
      %p161 = scmp.ne.s32.totalorder %s150, %s151
      %p162 = scmp.eq.s32.totalorder %s26, 0
      %p163 = por %p161, %p162
      %p164 = scmp.ne.s32.totalorder %s150, %s151
      %p165 = scmp.eq.s32.totalorder %s27, 7
      %p166 = por %p164, %p165
      %p168 = scmp.ne.s32.totalorder %s151, %s167
      %p169 = scmp.eq.s32.totalorder %s27, 0
      %p170 = por %p168, %p169
      %s171 = ssub.s32 %s29, %s36
      %p172 = scmp.eq.s32.totalorder %s171, 0
      %s174 = sadd.s32 %s173, 1
      %s175 = scalar_select %p172, %s173, %s174
      %p178 = pneg %p172
      %p179 = scmp.eq.s32.totalorder %s21, 7
      %p180 = por %p178, %p179
      %p181 = scmp.ne.s32.totalorder %s173, %s176
      %p182 = scmp.eq.s32.totalorder %s21, 0
      %p183 = por %p181, %p182
      %p184 = scmp.ne.s32.totalorder %s173, %s176
      %p185 = scmp.eq.s32.totalorder %s26, 7
      %p186 = por %p184, %p185
      %p187 = scmp.ne.s32.totalorder %s176, %s177
      %p188 = scmp.eq.s32.totalorder %s26, 0
      %p189 = por %p187, %p188
      %p190 = scmp.ne.s32.totalorder %s176, %s177
      %p191 = scmp.eq.s32.totalorder %s27, 7
      %p192 = por %p190, %p191
      %p194 = scmp.ne.s32.totalorder %s177, %s193
      %p195 = scmp.eq.s32.totalorder %s27, 0
      %p196 = por %p194, %p195
      %s198 = sadd.s32 %s197, 1
      %p201 = scmp.eq.s32.totalorder %s21, 7
      %p202 = scmp.ne.s32.totalorder %s197, %s199
      %p203 = scmp.eq.s32.totalorder %s21, 0
      %p204 = por %p202, %p203
      %p205 = scmp.ne.s32.totalorder %s197, %s199
      %p206 = scmp.eq.s32.totalorder %s26, 7
      %p207 = por %p205, %p206
      %p208 = scmp.ne.s32.totalorder %s199, %s200
      %p209 = scmp.eq.s32.totalorder %s26, 0
      %p210 = por %p208, %p209
      %p211 = scmp.ne.s32.totalorder %s199, %s200
      %p212 = scmp.eq.s32.totalorder %s27, 7
      %p213 = por %p211, %p212
      %p215 = scmp.ne.s32.totalorder %s200, %s214
      %p216 = scmp.eq.s32.totalorder %s27, 0
      %p217 = por %p215, %p216
      %s218 = ssub.s32 %s28, %s40
      %p219 = scmp.eq.s32.totalorder %s218, 0
      %s221 = sadd.s32 %s220, 1
      %s222 = scalar_select %p219, %s220, %s221
      %p225 = pneg %p219
      %p226 = scmp.eq.s32.totalorder %s21, 7
      %p227 = por %p225, %p226
      %p228 = scmp.ne.s32.totalorder %s220, %s223
      %p229 = scmp.eq.s32.totalorder %s21, 0
      %p230 = por %p228, %p229
      %p231 = scmp.ne.s32.totalorder %s220, %s223
      %p232 = scmp.eq.s32.totalorder %s26, 7
      %p233 = por %p231, %p232
      %p234 = scmp.ne.s32.totalorder %s223, %s224
      %p235 = scmp.eq.s32.totalorder %s26, 0
      %p236 = por %p234, %p235
      %p237 = scmp.ne.s32.totalorder %s223, %s224
      %p238 = scmp.eq.s32.totalorder %s27, 7
      %p239 = por %p237, %p238
      %p241 = scmp.ne.s32.totalorder %s224, %s240
      %p242 = scmp.eq.s32.totalorder %s27, 0
      %p243 = por %p241, %p242
      %s244 = ssub.s32 %s28, %s40
      %s245 = ssub.s32 %s29, %s36
      %s246 = sor.u32 %s244, %s245
      %p247 = scmp.eq.s32.totalorder %s246, 0
      %s249 = sadd.s32 %s248, 1
      %s250 = scalar_select %p247, %s248, %s249
      %p253 = pneg %p247
      %p254 = scmp.eq.s32.totalorder %s21, 7
      %p255 = por %p253, %p254
      %p256 = scmp.ne.s32.totalorder %s248, %s251
      %p257 = scmp.eq.s32.totalorder %s21, 0
      %p258 = por %p256, %p257
      %p259 = scmp.ne.s32.totalorder %s248, %s251
      %p260 = scmp.eq.s32.totalorder %s26, 7
      %p261 = por %p259, %p260
      %p262 = scmp.ne.s32.totalorder %s251, %s252
      %p263 = scmp.eq.s32.totalorder %s26, 0
      %p264 = por %p262, %p263
      %p265 = scmp.ne.s32.totalorder %s251, %s252
      %p266 = scmp.eq.s32.totalorder %s27, 7
      %p267 = por %p265, %p266
      %p269 = scmp.ne.s32.totalorder %s252, %s268
      %p270 = scmp.eq.s32.totalorder %s27, 0
      %p271 = por %p269, %p270
      %p272 = scmp.le.s32.totalorder 1, %s21
      %p273 = scmp.lt.s32.totalorder %s21, 9
      %p274 = pnand %p272, %p273
      %p275 = pneg %p274
      // Predicated region
      $region9: #{tpu_custom_call.1} parent=5 // pred_check
        _
      $region10: #{tpu_custom_call.1} parent=5 // pred_check_branch
        %277 = sbr.rel (%p274) target = $region12
      $region11: #{tpu_custom_call.1} parent=5 // pred_region
        %s278 = ssub.s32 %s21, 1
        // Predicated region
        $region13: #{tpu_custom_call.1} parent=11 // pred_check
          %p279 = pneg %p210
        $region14: #{tpu_custom_call.1} parent=11 // pred_check_branch
          %281 = sbr.rel (%p279) target = $region16
        $region15: #{tpu_custom_call.1} parent=11 // pred_region
          _
        $region16: #{tpu_custom_call.1} parent=11 // pred_fallthru
          _
      $region12: #{tpu_custom_call.1} parent=5 // pred_fallthru
        _
      %p282 = scmp.lt.s32.totalorder %s21, 8
      // Predicated region
      $region17: #{tpu_custom_call.1} parent=5 // pred_check
        %p283 = pneg %p282
      $region18: #{tpu_custom_call.1} parent=5 // pred_check_branch
        %285 = sbr.rel (%p283) target = $region20
      $region19: #{tpu_custom_call.1} parent=5 // pred_region
        // Predicated region
        $region21: #{tpu_custom_call.1} parent=19 // pred_check
          %p286 = pneg %p53
        $region22: #{tpu_custom_call.1} parent=19 // pred_check_branch
          %288 = sbr.rel (%p286) target = $region24
        $region23: #{tpu_custom_call.1} parent=19 // pred_region
          %p289 = scmp.lt.s32.totalorder %s28, 1
          %s290 = scalar_select %p289, %s28, 1
          %s291 = smul.addr %s290, 4
          %s292 = scalar_lea.vmem %s0, %s291
        $region24: #{tpu_custom_call.1} parent=19 // pred_fallthru
          _
        // Predicated region
        $region25: #{tpu_custom_call.1} parent=19 // pred_check
          %p293 = pneg %p79
        $region26: #{tpu_custom_call.1} parent=19 // pred_check_branch
          %295 = sbr.rel (%p293) target = $region28
        $region27: #{tpu_custom_call.1} parent=19 // pred_region
          %p296 = scmp.lt.s32.totalorder %s28, 1
          %s297 = scalar_select %p296, %s28, 1
          %s298 = smul.addr %s297, 2
          %s299 = smul.addr %s298, 4
          %s300 = scalar_lea.vmem %s1, %s299
        $region28: #{tpu_custom_call.1} parent=19 // pred_fallthru
          _
        // Predicated region
        $region29: #{tpu_custom_call.1} parent=19 // pred_check
          %p301 = pneg %p105
        $region30: #{tpu_custom_call.1} parent=19 // pred_check_branch
          %303 = sbr.rel (%p301) target = $region32
        $region31: #{tpu_custom_call.1} parent=19 // pred_region
          %p304 = scmp.lt.s32.totalorder %s29, 3
          %s305 = scalar_select %p304, %s29, 3
          %s306 = smul.addr %s305, 4
          %s307 = smul.addr %s306, 4
          %s308 = scalar_lea.vmem %s2, %s307
        $region32: #{tpu_custom_call.1} parent=19 // pred_fallthru
          _
        // Predicated region
        $region33: #{tpu_custom_call.1} parent=19 // pred_check
          %p309 = pneg %p131
        $region34: #{tpu_custom_call.1} parent=19 // pred_check_branch
          %311 = sbr.rel (%p309) target = $region36
        $region35: #{tpu_custom_call.1} parent=19 // pred_region
          %p312 = scmp.lt.s32.totalorder %s29, 3
          %s313 = scalar_select %p312, %s29, 3
          %s314 = smul.addr %s313, 4
          %s315 = smul.addr %s314, 4
          %s316 = scalar_lea.vmem %s3, %s315
        $region36: #{tpu_custom_call.1} parent=19 // pred_fallthru
          _
        // Predicated region
        $region37: #{tpu_custom_call.1} parent=19 // pred_check
          %p317 = pneg %p157
        $region38: #{tpu_custom_call.1} parent=19 // pred_check_branch
          %319 = sbr.rel (%p317) target = $region40
        $region39: #{tpu_custom_call.1} parent=19 // pred_region
          %p320 = scmp.lt.s32.totalorder %s29, 3
          %s321 = scalar_select %p320, %s29, 3
          %s322 = smul.addr %s321, 4
          %s323 = smul.addr %s322, 4
          %s324 = scalar_lea.vmem %s4, %s323
        $region40: #{tpu_custom_call.1} parent=19 // pred_fallthru
          _
        // Predicated region
        $region41: #{tpu_custom_call.1} parent=19 // pred_check
          %p325 = pneg %p183
        $region42: #{tpu_custom_call.1} parent=19 // pred_check_branch
          %327 = sbr.rel (%p325) target = $region44
        $region43: #{tpu_custom_call.1} parent=19 // pred_region
          %p328 = scmp.lt.s32.totalorder %s29, 3
          %s329 = scalar_select %p328, %s29, 3
          %s330 = smul.addr %s329, 4
          %s331 = scalar_lea.vmem %s5, %s330
        $region44: #{tpu_custom_call.1} parent=19 // pred_fallthru
          _
      $region20: #{tpu_custom_call.1} parent=5 // pred_fallthru
        _
      %p332 = scmp.le.s32.totalorder 1, %s21
      %p333 = scmp.lt.s32.totalorder %s21, 9
      %p334 = pnand %p332, %p333
      %p335 = pneg %p334
      // Predicated region
      $region45: #{tpu_custom_call.1} parent=5 // pred_check
        _
      $region46: #{tpu_custom_call.1} parent=5 // pred_check_branch
        %337 = sbr.rel (%p334) target = $region48
      $region47: #{tpu_custom_call.1} parent=5 // pred_region
        %s338 = ssub.s32 %s21, 1
        %p339 = scmp.lt.s32.totalorder %s30, 1
        %s340 = scalar_select %p339, %s30, 1
        %s341 = smul.addr %s340, 4
        %s342 = scalar_lea.vmem %s0, %s341
        %p343 = pneg %p59
        %p344 = pneg %p56
        %p345 = scmp.lt.s32.totalorder %s30, 1
        %s346 = scalar_select %p345, %s30, 1
        %s347 = smul.addr %s346, 2
        %s348 = smul.addr %s347, 4
        %s349 = scalar_lea.vmem %s1, %s348
        %p350 = pneg %p85
        %p351 = pneg %p82
        %p352 = scmp.lt.s32.totalorder %s31, 3
        %s353 = scalar_select %p352, %s31, 3
        %s354 = smul.addr %s353, 4
        %s355 = smul.addr %s354, 4
        %s356 = scalar_lea.vmem %s2, %s355
        %p357 = pneg %p111
        %p358 = pneg %p108
        %p359 = scmp.lt.s32.totalorder %s31, 3
        %s360 = scalar_select %p359, %s31, 3
        %s361 = smul.addr %s360, 4
        %s362 = smul.addr %s361, 4
        %s363 = scalar_lea.vmem %s3, %s362
        %p364 = pneg %p137
        %p365 = pneg %p134
        %p366 = scmp.lt.s32.totalorder %s31, 3
        %s367 = scalar_select %p366, %s31, 3
        %s368 = smul.addr %s367, 4
        %s369 = smul.addr %s368, 4
        %s370 = scalar_lea.vmem %s4, %s369
        %p371 = pneg %p163
        %p372 = pneg %p160
        %p373 = scmp.lt.s32.totalorder %s31, 3
        %s374 = scalar_select %p373, %s31, 3
        %s375 = smul.addr %s374, 4
        %s376 = scalar_lea.vmem %s5, %s375
        %p377 = pneg %p189
        %p378 = pneg %p186
        %p379 = pneg %p210
        %p380 = pneg %p207
        %p381 = pneg %p236
        %p382 = pneg %p233
        %s383 = sand.u32 %s223, 1
        %s384 = scalar_lea.sflag [#allocation3], %s383
        %s385 = sand.u32 %s223, 1
        %s386 = smul.addr %s385, 8
        %s387 = scalar_lea.vmem [#allocation2], %s386
        %p388 = pneg %p264
        %p389 = pneg %p261
        %s390 = sand.u32 %s251, 1
        %s391 = scalar_lea.sflag [#allocation5], %s390
        %s392 = sand.u32 %s251, 1
        %s393 = smul.addr %s392, 8
        %s394 = scalar_lea.vmem [#allocation4], %s393
        %p395 = scmp.lt.s32.totalorder %s30, 1
        %s396 = scalar_select %p395, %s30, 1
        %s397 = smul.addr %s396, 4
        %s398 = scalar_lea.vmem %s0, %s397
        %p399 = scmp.lt.s32.totalorder %s30, 1
        %s400 = scalar_select %p399, %s30, 1
        %s401 = smul.addr %s400, 2
        %s402 = smul.addr %s401, 4
        %s403 = scalar_lea.vmem %s1, %s402
        %p404 = scmp.lt.s32.totalorder %s31, 3
        %s405 = scalar_select %p404, %s31, 3
        %s406 = smul.addr %s405, 4
        %s407 = smul.addr %s406, 4
        %s408 = scalar_lea.vmem %s2, %s407
        %p409 = scmp.lt.s32.totalorder %s31, 3
        %s410 = scalar_select %p409, %s31, 3
        %s411 = smul.addr %s410, 4
        %s412 = smul.addr %s411, 4
        %s413 = scalar_lea.vmem %s3, %s412
        %p414 = scmp.lt.s32.totalorder %s31, 3
        %s415 = scalar_select %p414, %s31, 3
        %s416 = smul.addr %s415, 4
        %s417 = smul.addr %s416, 4
        %s418 = scalar_lea.vmem %s4, %s417
        %p419 = scmp.lt.s32.totalorder %s31, 3
        %s420 = scalar_select %p419, %s31, 3
        %s421 = smul.addr %s420, 4
        %s422 = scalar_lea.vmem %s5, %s421
        %v424 = vld [vmem:[%s398] sm:$0xf]
        %v425 = vld [vmem:[%s403] sm:$0xf]
        %v426 = vld [vmem:[%s403 + $0x4] sm:$0xf]
        %v427 = vld [vmem:[%s408] sm:$0xf]
        %v428 = vld [vmem:[%s408 + $0x4] sm:$0xf]
        %v429 = vld [vmem:[%s408 + $0x8] sm:$0xf]
        %v430 = vld [vmem:[%s408 + $0xc] sm:$0xf]
        %v431 = vld [vmem:[%s413] sm:$0xf]
        %v432 = vld [vmem:[%s413 + $0x4] sm:$0xf]
        %v433 = vld [vmem:[%s413 + $0x8] sm:$0xf]
        %v434 = vld [vmem:[%s413 + $0xc] sm:$0xf]
        %v435 = vld [vmem:[%s418] sm:$0xf]
        %v436 = vld [vmem:[%s418 + $0x4] sm:$0xf]
        %v437 = vld [vmem:[%s418 + $0x8] sm:$0xf]
        %v438 = vld [vmem:[%s418 + $0xc] sm:$0xf]
        %v439 = vld [vmem:[%s422] sm:$0xf]
        %v444 = vunpack.c.l.b16 %v427
        %v445 = vunpack.c.l.b16 %v428
        %v446 = vunpack.c.l.b16 %v429
        %v447 = vunpack.c.l.b16 %v430
        %v448 = vpack.c.b16 %v445, %v444
        %v449 = vpack.c.b16 %v447, %v446
        %vm452 = vcmask 261120
        %v454 = vsel %vm452, %v424, 0
        %456 = vmatprep.subr.bf16.mxu0 0
        %457 = vmatpush1.bf16.msra.mxu0 0
        %458 = vmatprep.subr.bf16.mxu0 0
        %459 = vmatpush1.bf16.msra.mxu0 0
        %460 = vmatprep.subr.bf16.mxu0 0
        %461 = vmatpush1.bf16.msra.mxu0 0
        %462 = vmatprep.subr.bf16.mxu0 0
        %463 = vmatpush1.bf16.msra.mxu0 0
        %464 = vmatprep.subr.bf16.mxu0 0
        %465 = vmatpush1.bf16.msra.mxu0 0
        %466 = vmatprep.subr.bf16.mxu0 0
        %467 = vmatpush1.bf16.msra.mxu0 0
        %468 = vmatprep.subr.bf16.mxu0 0
        %469 = vmatpush1.bf16.msra.mxu0 %v449
        %470 = vmatprep.subr.bf16.mxu0 0
        %471 = vmatpush1.bf16.msra.mxu0 %v448
        %472 = vmatprep.subr.bf16.mxu0 0
        %473 = vmatpush2.bf16.msra.mxu0 0
        %474 = vmatprep.subr.bf16.mxu0 0
        %475 = vmatpush2.bf16.msra.mxu0 0
        %476 = vmatprep.subr.bf16.mxu0 0
        %477 = vmatpush2.bf16.msra.mxu0 0
        %478 = vmatprep.subr.bf16.mxu0 0
        %479 = vmatpush2.bf16.msra.mxu0 0
        %480 = vmatprep.subr.bf16.mxu0 0
        %481 = vmatpush2.bf16.msra.mxu0 0
        %482 = vmatprep.subr.bf16.mxu0 0
        %483 = vmatpush2.bf16.msra.mxu0 0
        %484 = vmatprep.subr.bf16.mxu0 0
        %485 = vmatpush2.bf16.msra.mxu0 0
        %486 = vmatprep.subr.bf16.mxu0 0
        %487 = vmatpush2.bf16.msra.mxu0 0
        %488 = vmatprep.mubr.bf16.mxu0 0
        %489 = vmatmul.mubr.bf16.gmra.mxu0 %v454
        %v490 = vpop.f32.mrf.mxu0
        %v491 = vadd.f32 0.0, %v490
        %v492 = vpop.f32.mrf.mxu0
        %v493 = vpop.f32.mrf.mxu0
        %v494 = vpop.f32.mrf.mxu0
        %495 = vdwg.mxu0
        %v496 = vmul.f32 %v491, 0.35355338
        %v499 = vunpack.c.l.b16 %v425
        %v500 = vunpack.c.l.b16 %v426
        %v501 = vpack.c.b16 %v500, %v499
        %v506 = vunpack.c.l.b16 %v431
        %v507 = vunpack.c.l.b16 %v432
        %v508 = vunpack.c.l.b16 %v433
        %v509 = vunpack.c.l.b16 %v434
        %v510 = vpack.c.b16 %v507, %v506
        %v511 = vpack.c.b16 %v509, %v508
        %v515 = vsel %vm452, %v501, 0
        %517 = vmatprep.subr.bf16.mxu0 0
        %518 = vmatpush1.bf16.msra.mxu0 0
        %519 = vmatprep.subr.bf16.mxu0 0
        %520 = vmatpush1.bf16.msra.mxu0 0
        %521 = vmatprep.subr.bf16.mxu0 0
        %522 = vmatpush1.bf16.msra.mxu0 0
        %523 = vmatprep.subr.bf16.mxu0 0
        %524 = vmatpush1.bf16.msra.mxu0 0
        %525 = vmatprep.subr.bf16.mxu0 0
        %526 = vmatpush1.bf16.msra.mxu0 0
        %527 = vmatprep.subr.bf16.mxu0 0
        %528 = vmatpush1.bf16.msra.mxu0 0
        %529 = vmatprep.subr.bf16.mxu0 0
        %530 = vmatpush1.bf16.msra.mxu0 %v511
        %531 = vmatprep.subr.bf16.mxu0 0
        %532 = vmatpush1.bf16.msra.mxu0 %v510
        %533 = vmatprep.subr.bf16.mxu0 0
        %534 = vmatpush2.bf16.msra.mxu0 0
        %535 = vmatprep.subr.bf16.mxu0 0
        %536 = vmatpush2.bf16.msra.mxu0 0
        %537 = vmatprep.subr.bf16.mxu0 0
        %538 = vmatpush2.bf16.msra.mxu0 0
        %539 = vmatprep.subr.bf16.mxu0 0
        %540 = vmatpush2.bf16.msra.mxu0 0
        %541 = vmatprep.subr.bf16.mxu0 0
        %542 = vmatpush2.bf16.msra.mxu0 0
        %543 = vmatprep.subr.bf16.mxu0 0
        %544 = vmatpush2.bf16.msra.mxu0 0
        %545 = vmatprep.subr.bf16.mxu0 0
        %546 = vmatpush2.bf16.msra.mxu0 0
        %547 = vmatprep.subr.bf16.mxu0 0
        %548 = vmatpush2.bf16.msra.mxu0 0
        %549 = vmatprep.mubr.bf16.mxu0 0
        %550 = vmatmul.mubr.bf16.gmra.mxu0 %v515
        %v551 = vpop.f32.mrf.mxu0
        %v552 = vadd.f32 0.0, %v551
        %v553 = vpop.f32.mrf.mxu0
        %v554 = vpop.f32.mrf.mxu0
        %v555 = vadd.f32 0.0, %v554
        %v556 = vpop.f32.mrf.mxu0
        %557 = vdwg.mxu0
        %v562 = vunpack.c.l.b16 %v435
        %v563 = vunpack.c.l.b16 %v436
        %v564 = vunpack.c.l.b16 %v437
        %v565 = vunpack.c.l.b16 %v438
        %v566 = vpack.c.b16 %v563, %v562
        %v567 = vpack.c.b16 %v565, %v564
        %570 = vmatprep.subr.bf16.mxu0 0
        %571 = vmatpush1.bf16.msra.mxu0 0
        %572 = vmatprep.subr.bf16.mxu0 0
        %573 = vmatpush1.bf16.msra.mxu0 0
        %574 = vmatprep.subr.bf16.mxu0 0
        %575 = vmatpush1.bf16.msra.mxu0 0
        %576 = vmatprep.subr.bf16.mxu0 0
        %577 = vmatpush1.bf16.msra.mxu0 0
        %578 = vmatprep.subr.bf16.mxu0 0
        %579 = vmatpush1.bf16.msra.mxu0 0
        %580 = vmatprep.subr.bf16.mxu0 0
        %581 = vmatpush1.bf16.msra.mxu0 0
        %582 = vmatprep.subr.bf16.mxu0 0
        %583 = vmatpush1.bf16.msra.mxu0 %v567
        %584 = vmatprep.subr.bf16.mxu0 0
        %585 = vmatpush1.bf16.msra.mxu0 %v566
        %586 = vmatprep.subr.bf16.mxu0 0
        %587 = vmatpush2.bf16.msra.mxu0 0
        %588 = vmatprep.subr.bf16.mxu0 0
        %589 = vmatpush2.bf16.msra.mxu0 0
        %590 = vmatprep.subr.bf16.mxu0 0
        %591 = vmatpush2.bf16.msra.mxu0 0
        %592 = vmatprep.subr.bf16.mxu0 0
        %593 = vmatpush2.bf16.msra.mxu0 0
        %594 = vmatprep.subr.bf16.mxu0 0
        %595 = vmatpush2.bf16.msra.mxu0 0
        %596 = vmatprep.subr.bf16.mxu0 0
        %597 = vmatpush2.bf16.msra.mxu0 0
        %598 = vmatprep.subr.bf16.mxu0 0
        %599 = vmatpush2.bf16.msra.mxu0 0
        %600 = vmatprep.subr.bf16.mxu0 0
        %601 = vmatpush2.bf16.msra.mxu0 0
        %602 = vmatprep.mubr.bf16.mxu0 0
        %603 = vmatmul.mubr.bf16.gmra.mxu0 %v515
        %v604 = vpop.f32.mrf.mxu0
        %v605 = vadd.f32 0.0, %v604
        %v606 = vpop.f32.mrf.mxu0
        %v607 = vpop.f32.mrf.mxu0
        %v608 = vadd.f32 0.0, %v607
        %v609 = vpop.f32.mrf.mxu0
        %610 = vdwg.mxu0
        %vm611 = vcmask 64512
        %v613 = vsel %vm611, %v496, 0
        %v616 = vsel %vm611, %v552, 0
        %v619 = vsel %vm611, %v555, 0
        %621 = vmatprep.subr.mxu0 0.0
        %622 = vmatpush1.xpose.msra.mxu0 0.0
        %623 = vmatprep.subr.mxu0 0.0
        %624 = vmatpush1.xpose.msra.mxu0 0.0
        %625 = vmatprep.subr.mxu0 0.0
        %626 = vmatpush1.xpose.msra.mxu0 0.0
        %627 = vmatprep.subr.mxu0 0.0
        %628 = vmatpush1.xpose.msra.mxu0 0.0
        %629 = vmatprep.subr.mxu0 0.0
        %630 = vmatpush1.xpose.msra.mxu0 0.0
        %631 = vmatprep.subr.mxu0 0.0
        %632 = vmatpush1.xpose.msra.mxu0 0.0
        %633 = vmatprep.subr.mxu0 0.0
        %634 = vmatpush1.xpose.msra.mxu0 0.0
        %635 = vmatprep.subr.mxu0 0.0
        %636 = vmatpush1.xpose.msra.mxu0 0.0
        %637 = vmatprep.subr.mxu0 0.0
        %638 = vmatpush1.xpose.msra.mxu0 0.0
        %639 = vmatprep.subr.mxu0 0.0
        %640 = vmatpush1.xpose.msra.mxu0 0.0
        %641 = vmatprep.subr.mxu0 0.0
        %642 = vmatpush1.xpose.msra.mxu0 0.0
        %643 = vmatprep.subr.mxu0 0.0
        %644 = vmatpush1.xpose.msra.mxu0 0.0
        %645 = vmatprep.subr.mxu0 0.0
        %646 = vmatpush1.xpose.msra.mxu0 0.0
        %647 = vmatprep.subr.mxu0 0.0
        %648 = vmatpush1.xpose.msra.mxu0 0.0
        %649 = vmatprep.subr.mxu0 0.0
        %650 = vmatpush1.xpose.msra.mxu0 %v619
        %651 = vmatprep.subr.mxu0 0.0
        %652 = vmatpush1.xpose.msra.mxu0 %v616
        %653 = vmatprep.subr.mxu0 0.0
        %654 = vmatpush2.xpose.msra.mxu0 0.0
        %655 = vmatprep.subr.mxu0 0.0
        %656 = vmatpush2.xpose.msra.mxu0 0.0
        %657 = vmatprep.subr.mxu0 0.0
        %658 = vmatpush2.xpose.msra.mxu0 0.0
        %659 = vmatprep.subr.mxu0 0.0
        %660 = vmatpush2.xpose.msra.mxu0 0.0
        %661 = vmatprep.subr.mxu0 0.0
        %662 = vmatpush2.xpose.msra.mxu0 0.0
        %663 = vmatprep.subr.mxu0 0.0
        %664 = vmatpush2.xpose.msra.mxu0 0.0
        %665 = vmatprep.subr.mxu0 0.0
        %666 = vmatpush2.xpose.msra.mxu0 0.0
        %667 = vmatprep.subr.mxu0 0.0
        %668 = vmatpush2.xpose.msra.mxu0 0.0
        %669 = vmatprep.subr.mxu0 0.0
        %670 = vmatpush2.xpose.msra.mxu0 0.0
        %671 = vmatprep.subr.mxu0 0.0
        %672 = vmatpush2.xpose.msra.mxu0 0.0
        %673 = vmatprep.subr.mxu0 0.0
        %674 = vmatpush2.xpose.msra.mxu0 0.0
        %675 = vmatprep.subr.mxu0 0.0
        %676 = vmatpush2.xpose.msra.mxu0 0.0
        %677 = vmatprep.subr.mxu0 0.0
        %678 = vmatpush2.xpose.msra.mxu0 0.0
        %679 = vmatprep.subr.mxu0 0.0
        %680 = vmatpush2.xpose.msra.mxu0 0.0
        %681 = vmatprep.subr.mxu0 0.0
        %682 = vmatpush2.xpose.msra.mxu0 0.0
        %683 = vmatprep.subr.mxu0 0.0
        %684 = vmatpush2.xpose.msra.mxu0 0.0
        %685 = vmatprep.mubr.f32.mxu0 0.0
        %686 = vmatmul.mubr.f32.gmra.mxu0 %v613
        %v687 = vpop.f32.mrf.mxu0
        %v688 = vadd.f32 0.0, %v687
        %v689 = vpop.f32.mrf.mxu0
        %690 = vdwg.mxu0
        %vm691 = vcmask 130048
        %v692 = vsel %vm691, %v688, -inf
        %693 = vmax.xlane.f32.xlu0 %v692
        %v694 = vpop.xlane.xlu0 %693
        %v695 = vsub.f32 %v688, %v694
        %v696 = vmul.f32 %v695, 1.442695
        %v697 = vpow.pop %v696
        %v698 = vsel %vm691, %v697, 0.0
        %699 = vadd.xlane.f32.xlu0 %v698
        %v700 = vpop.xlane.xlu0 %699
        %v701 = vrcp.pop %v700
        %v702 = vmul.f32 %v697, %v701
        %703 = vst.msk [vmem:[%s394] sm:$0xff] %vm691, %v702
        %v704 = vpack.c.bf16 %v702, %v702
        %v705 = vpack.c.bf16 %v608, %v605
        %v707 = vsel %vm691, %v704, 0
        %709 = vmatprep.subr.bf16.mxu0 0
        %710 = vmatpush1.bf16.msra.mxu0 0
        %711 = vmatprep.subr.bf16.mxu0 0
        %712 = vmatpush1.bf16.msra.mxu0 0
        %713 = vmatprep.subr.bf16.mxu0 0
        %714 = vmatpush1.bf16.msra.mxu0 0
        %715 = vmatprep.subr.bf16.mxu0 0
        %716 = vmatpush1.bf16.msra.mxu0 0
        %717 = vmatprep.subr.bf16.mxu0 0
        %718 = vmatpush1.bf16.msra.mxu0 0
        %719 = vmatprep.subr.bf16.mxu0 0
        %720 = vmatpush1.bf16.msra.mxu0 0
        %721 = vmatprep.subr.bf16.mxu0 0
        %722 = vmatpush1.bf16.msra.mxu0 0
        %723 = vmatprep.subr.bf16.mxu0 0
        %724 = vmatpush1.bf16.msra.mxu0 %v705
        %725 = vmatprep.subr.bf16.mxu0 0
        %726 = vmatpush2.bf16.msra.mxu0 0
        %727 = vmatprep.subr.bf16.mxu0 0
        %728 = vmatpush2.bf16.msra.mxu0 0
        %729 = vmatprep.subr.bf16.mxu0 0
        %730 = vmatpush2.bf16.msra.mxu0 0
        %731 = vmatprep.subr.bf16.mxu0 0
        %732 = vmatpush2.bf16.msra.mxu0 0
        %733 = vmatprep.subr.bf16.mxu0 0
        %734 = vmatpush2.bf16.msra.mxu0 0
        %735 = vmatprep.subr.bf16.mxu0 0
        %736 = vmatpush2.bf16.msra.mxu0 0
        %737 = vmatprep.subr.bf16.mxu0 0
        %738 = vmatpush2.bf16.msra.mxu0 0
        %739 = vmatprep.subr.bf16.mxu0 0
        %740 = vmatpush2.bf16.msra.mxu0 0
        %741 = vmatprep.mubr.bf16.mxu0 0
        %742 = vmatmul.mubr.bf16.gmra.mxu0 %v707
        %v743 = vpop.f32.mrf.mxu0
        %v744 = vadd.f32 0.0, %v743
        %v745 = vpop.f32.mrf.mxu0
        %v746 = vpop.f32.mrf.mxu0
        %v747 = vpop.f32.mrf.mxu0
        %748 = vdwg.mxu0
        %p749 = scmp.eq.s32.totalorder %s31, 0
        // Predicated region
        $region49: #{tpu_custom_call.1} parent=47 // pred_check
          %p750 = pneg %p749
        $region50: #{tpu_custom_call.1} parent=47 // pred_check_branch
          %752 = sbr.rel (%p750) target = $region52
        $region51: #{tpu_custom_call.1} parent=47 // pred_region
          %v753 = vld [vmem:[%s6] sm:$0x1]
          %v755 = vlaneseq
          %v756 = vshrl.u32 %v755, 7
          %v757 = vsub.s32 0, %v756
          %v758 = vrot.slane %v753, %v757
          %760 = vst.msk [vmem:[%s387] sm:$0xff] %vm452, %v758
        $region52: #{tpu_custom_call.1} parent=47 // pred_fallthru
          _
        %v761 = vld [vmem:[%s387] sm:$0xff]
        %v762 = vpack.c.bf16 %v744, %v744
        %v764 = vsel %vm611, %v762, 0
        %vm766 = vcmask 1043456
        %v768 = vsel %vm766, %v439, 0
        %770 = vmatprep.subr.bf16.mxu0 0
        %771 = vmatpush1.bf16.msra.mxu0 0
        %772 = vmatprep.subr.bf16.mxu0 0
        %773 = vmatpush1.bf16.msra.mxu0 0
        %774 = vmatprep.subr.bf16.mxu0 0
        %775 = vmatpush1.bf16.msra.mxu0 0
        %776 = vmatprep.subr.bf16.mxu0 0
        %777 = vmatpush1.bf16.msra.mxu0 0
        %778 = vmatprep.subr.bf16.mxu0 0
        %779 = vmatpush1.bf16.msra.mxu0 0
        %780 = vmatprep.subr.bf16.mxu0 0
        %781 = vmatpush1.bf16.msra.mxu0 0
        %782 = vmatprep.subr.bf16.mxu0 0
        %783 = vmatpush1.bf16.msra.mxu0 0
        %784 = vmatprep.subr.bf16.mxu0 0
        %785 = vmatpush1.bf16.msra.mxu0 %v768
        %786 = vmatprep.subr.bf16.mxu0 0
        %787 = vmatpush2.bf16.msra.mxu0 0
        %788 = vmatprep.subr.bf16.mxu0 0
        %789 = vmatpush2.bf16.msra.mxu0 0
        %790 = vmatprep.subr.bf16.mxu0 0
        %791 = vmatpush2.bf16.msra.mxu0 0
        %792 = vmatprep.subr.bf16.mxu0 0
        %793 = vmatpush2.bf16.msra.mxu0 0
        %794 = vmatprep.subr.bf16.mxu0 0
        %795 = vmatpush2.bf16.msra.mxu0 0
        %796 = vmatprep.subr.bf16.mxu0 0
        %797 = vmatpush2.bf16.msra.mxu0 0
        %798 = vmatprep.subr.bf16.mxu0 0
        %799 = vmatpush2.bf16.msra.mxu0 0
        %800 = vmatprep.subr.bf16.mxu0 0
        %801 = vmatpush2.bf16.msra.mxu0 0
        %802 = vmatprep.mubr.bf16.mxu0 0
        %803 = vmatmul.mubr.bf16.gmra.mxu0 %v764
        %v804 = vpop.f32.mrf.mxu0
        %v805 = vadd.f32 0.0, %v804
        %v806 = vpop.f32.mrf.mxu0
        %v807 = vpop.f32.mrf.mxu0
        %v808 = vpop.f32.mrf.mxu0
        %809 = vdwg.mxu0
        %v810 = vadd.f32 %v761, %v805
        %811 = vst.msk [vmem:[%s387] sm:$0xff] %vm452, %v810
        %s812 = sand.u32 %s223, 1
        %s813 = scalar_lea.sflag [#allocation3], %s812
        %s814 = sand.u32 %s223, 1
        %s815 = smul.addr %s814, 8
        %s816 = scalar_lea.vmem [#allocation2], %s815
        %s817 = sand.u32 %s251, 1
        %s818 = scalar_lea.sflag [#allocation5], %s817
        %s819 = sand.u32 %s251, 1
        %s820 = smul.addr %s819, 8
        %s821 = scalar_lea.vmem [#allocation4], %s820
        // Predicated region
        $region53: #{tpu_custom_call.1} parent=47 // pred_check
          %p822 = pneg %p233
        $region54: #{tpu_custom_call.1} parent=47 // pred_check_branch
          %824 = sbr.rel (%p822) target = $region56
        $region55: #{tpu_custom_call.1} parent=47 // pred_region
          %s826 = ssub.s32 128, 128
          %827 = vsyncadd %s813, %s826
          %s828 = smul.addr %s30, 128
          %s829 = scalar_lea.hbm %s7, %s828
          %s831 = sshll.u32 %s816, 4
          %s832 = int_to_ptr.vmem [resolvable:$true] %s831
          %834 = dma.vmem_to_hbm [thread:$0]  %s832, 128, %s829, %s813
        $region56: #{tpu_custom_call.1} parent=47 // pred_fallthru
          _
        // Predicated region
        $region57: #{tpu_custom_call.1} parent=47 // pred_check
          %p835 = pneg %p261
        $region58: #{tpu_custom_call.1} parent=47 // pred_check_branch
          %837 = sbr.rel (%p835) target = $region60
        $region59: #{tpu_custom_call.1} parent=47 // pred_region
          %s839 = ssub.s32 128, 128
          %840 = vsyncadd %s818, %s839
          %s841 = smul.addr %s30, 4
          %s842 = sadd.s32 %s31, %s841
          %s843 = smul.addr %s842, 128
          %s844 = scalar_lea.hbm %s8, %s843
          %s846 = sshll.u32 %s821, 4
          %s847 = int_to_ptr.vmem [resolvable:$true] %s846
          %849 = dma.vmem_to_hbm [thread:$0]  %s847, 128, %s844, %s818
        $region60: #{tpu_custom_call.1} parent=47 // pred_fallthru
          _
      $region48: #{tpu_custom_call.1} parent=5 // pred_fallthru
        _
      %p850 = scmp.le.s32.totalorder 2, %s21
      // Predicated region
      $region61: #{tpu_custom_call.1} parent=5 // pred_check
        %p851 = pneg %p850
      $region62: #{tpu_custom_call.1} parent=5 // pred_check_branch
        %853 = sbr.rel (%p851) target = $region64
      $region63: #{tpu_custom_call.1} parent=5 // pred_region
        %s854 = ssub.s32 %s21, 2
        // Predicated region
        $region65: #{tpu_custom_call.1} parent=63 // pred_check
          %p855 = pneg %p239
        $region66: #{tpu_custom_call.1} parent=63 // pred_check_branch
          %857 = sbr.rel (%p855) target = $region68
        $region67: #{tpu_custom_call.1} parent=63 // pred_region
          %s858 = sand.u32 %s224, 1
          %s859 = scalar_lea.sflag [#allocation3], %s858
          %s860 = sand.u32 %s224, 1
          %s861 = smul.addr %s860, 8
          %s862 = scalar_lea.vmem [#allocation2], %s861
          %863 = dma.done %s859, 128
        $region68: #{tpu_custom_call.1} parent=63 // pred_fallthru
          _
        // Predicated region
        $region69: #{tpu_custom_call.1} parent=63 // pred_check
          %p864 = pneg %p267
        $region70: #{tpu_custom_call.1} parent=63 // pred_check_branch
          %866 = sbr.rel (%p864) target = $region72
        $region71: #{tpu_custom_call.1} parent=63 // pred_region
          %s867 = sand.u32 %s252, 1
          %s868 = scalar_lea.sflag [#allocation5], %s867
          %s869 = sand.u32 %s252, 1
          %s870 = smul.addr %s869, 8
          %s871 = scalar_lea.vmem [#allocation4], %s870
          %872 = dma.done %s868, 128
        $region72: #{tpu_custom_call.1} parent=63 // pred_fallthru
          _
      $region64: #{tpu_custom_call.1} parent=5 // pred_fallthru
        _
    $region6: #{tpu_custom_call.1} parent=1 // loop_footer
      %s25 = sadd.s32 1, %s21
    $region7: #{tpu_custom_call.1} parent=1 // loop_footer_branch
      %20 = sbr.rel target = $region3
    $region8: #{tpu_custom_call.1} parent=1 // loop_exit
      _
    %873 = vsyncpa [#allocation3], 1
    %s874 = scalar_lea.sflag [#allocation3], 1
    %875 = vsyncpa %s874, 1
    %876 = vsyncpa [#allocation5], 1
    %s877 = scalar_lea.sflag [#allocation5], 1
    %878 = vsyncpa %s877, 1

</llo_original>
